<compile_context>
chip_gen: v7x
topology: tpu7x:2x2x1
jax: 0.10.0
libtpu: 0.0.40
codegen_flags: <defaults>
</compile_context>

<pallas_src>
import jax
import jax.numpy as jnp
from jax.experimental import pallas as pl
from jax.experimental.pallas import tpu as pltpu

# CIFAR-10 normalization constants (from the module's __init__)
MEAN = (0.4914, 0.4822, 0.4465)
STD = (0.247, 0.243, 0.261)

_MIB = 1024 * 1024


def _target_block_bytes() -> int:
    # v7x: 64 MiB physical VMEM / 32 MiB scoped default, ~3.2 TB/s HBM ->
    # bigger (4 MiB) blocks amortise the ~0.35 us per-grid-step overhead;
    # double-buffered in+out (~16 MiB) still fits the scoped default.
    # v5e/v6e: keep 2 MiB blocks (under v5e's 16 MiB scoped default; already
    # ~85% of the HBM roofline there).
    try:
        if pltpu.get_tpu_info().vmem_capacity_bytes <= 64 * _MIB:
            return 4 * _MIB
    except Exception:  # conservative fallback if the query is unavailable
        pass
    return 2 * _MIB


def _normalize_kernel(x_ref, stats_ref, o_ref):
    # x_ref/o_ref: (TR, THW) tiles; stats_ref: (TR, 2) f32 with
    #   stats[:, 0] = 1/std   and   stats[:, 1] = -mean/std
    # so the kernel is a single fused multiply-add: out = x * a + b.
    x = x_ref[...].astype(jnp.float32)
    s = stats_ref[...]
    a = s[:, 0:1]
    b = s[:, 1:2]
    o_ref[...] = (x * a + b).astype(o_ref.dtype)


def normalize(x: jax.Array, mean=MEAN, std=STD, *, donate: bool = False) -> jax.Array:
    """(x - mean[None,:,None,None]) / std[None,:,None,None], x in NCHW.

    Set donate=True only when the caller does not reuse `x` afterwards; it
    aliases the output onto the input buffer (saves one HBM allocation).
    """
    N, C, H, W = x.shape
    rows = N * C
    hw = H * W
    itemsize = jnp.dtype(x.dtype).itemsize

    mean_f32 = jnp.asarray(mean, dtype=jnp.float32)
    inv_std_f32 = 1.0 / jnp.asarray(std, dtype=jnp.float32)

    # Per-row (n-major, c-minor) affine stats packed into one (rows, 2) array.
    scale_rows = jnp.tile(inv_std_f32, N)            # 1/std per row
    bias_rows = jnp.tile(-mean_f32 * inv_std_f32, N)  # -mean/std per row
    stats = jnp.stack([scale_rows, bias_rows], axis=1)  # (rows, 2) f32

    x2 = x.reshape(rows, hw)  # free, contiguous reshape

    # Lane-dense guard: pad last dim to a multiple of 128 (no-op for CIFAR).
    hw_padded = ((hw + 127) // 128) * 128
    padded = hw_padded != hw
    if padded:
        x2 = jnp.pad(x2, ((0, 0), (0, hw_padded - hw)))

    target = _target_block_bytes()
    bytes_per_row = hw_padded * itemsize

    if 8 * bytes_per_row > target:
        # Very wide rows (large H*W): also tile the lane dim so a block stays
        # ~target-sized and never exceeds scoped/physical VMEM.
        tr = 8
        thw = max(128, (target // (8 * itemsize)) // 128 * 128)
        thw = min(thw, hw_padded)
    else:
        thw = hw_padded
        tr = max(8, (target // bytes_per_row) // 8 * 8)
        if rows <= tr:
            tr = rows  # single row block; full-extent dims are always legal

    # Guarantee >=2 grid steps for non-trivial inputs so both v7x TensorCores
    # get streaming work (harmless on single-TC v5e/v6e).
    if pl.cdiv(rows, tr) * pl.cdiv(hw_padded, thw) == 1 and rows >= 16:
        tr = ((pl.cdiv(rows, 2) + 7) // 8) * 8

    grid = (pl.cdiv(rows, tr), pl.cdiv(hw_padded, thw))

    aliases = {0: 0} if (donate and not padded) else {}

    out2 = pl.pallas_call(
        _normalize_kernel,
        out_shape=jax.ShapeDtypeStruct((rows, hw_padded), x.dtype),
        grid_spec=pltpu.PrefetchScalarGridSpec(
            num_scalar_prefetch=0,
            grid=grid,
            in_specs=[
                pl.BlockSpec((tr, thw), lambda i, j: (i, j)),
                pl.BlockSpec((tr, 2), lambda i, j: (i, 0)),
            ],
            out_specs=pl.BlockSpec((tr, thw), lambda i, j: (i, j)),
        ),
        compiler_params=pltpu.CompilerParams(
            dimension_semantics=("parallel", "parallel"),
        ),
        cost_estimate=pl.CostEstimate(
            flops=2 * rows * hw,
            transcendentals=0,
            bytes_accessed=2 * rows * hw * itemsize + rows * 2 * 4,
        ),
        input_output_aliases=aliases,
    )(x2, stats)

    if padded:
        out2 = out2[:, :hw]
    return out2.reshape(N, C, H, W)


if __name__ == "__main__":
    key = jax.random.PRNGKey(0)
    # CIFAR-like small input: batch=8, 3 channels (the module hard-codes
    # 3-channel stats), 32x32 spatial.
    x = jax.random.uniform(key, (8, 3, 32, 32), dtype=jnp.float32)

    out = jax.block_until_ready(normalize(x))

    mean = jnp.asarray(MEAN, dtype=jnp.float32)
    std = jnp.asarray(STD, dtype=jnp.float32)
    ref = (x - mean[None, :, None, None]) / std[None, :, None, None]

    assert out.shape == x.shape and out.dtype == x.dtype
    err = float(jnp.max(jnp.abs(out - ref)))
    assert jnp.allclose(out, ref, atol=1e-5, rtol=1e-5), err

    print("KERNEL_OK")
</pallas_src>

<mosaic_0001>
module attributes {stable_mosaic.version = 11 : i64} {
  func.func @_normalize_kernel(%arg0: i32, %arg1: i32, %arg2: memref<16x1024xf32, #tpu.memory_space<vmem>>, %arg3: memref<16x2xf32, #tpu.memory_space<vmem>>, %arg4: memref<16x1024xf32, #tpu.memory_space<vmem>>) attributes {dimension_semantics = [#tpu.dimension_semantics<parallel>, #tpu.dimension_semantics<parallel>], iteration_bounds = array<i64: 2, 1>, scalar_prefetch = 0 : i64, scratch_operands = 0 : i64, tpu.core_type = #tpu.core_type<tc>, window_params = [{transform_indices = @transform_0, window_bounds = array<i64: 16, 1024>}, {transform_indices = @transform_1, window_bounds = array<i64: 16, 2>}, {transform_indices = @transform_2, window_bounds = array<i64: 16, 1024>}]} {
    %c0 = arith.constant 0 : index
    %c0_0 = arith.constant 0 : index
    %0 = vector.load %arg2[%c0, %c0_0] : memref<16x1024xf32, #tpu.memory_space<vmem>>, vector<16x1024xf32>
    %c0_1 = arith.constant 0 : index
    %c0_2 = arith.constant 0 : index
    %1 = vector.load %arg3[%c0_1, %c0_2] : memref<16x2xf32, #tpu.memory_space<vmem>>, vector<16x2xf32>
    %2 = vector.extract_strided_slice %1 {offsets = [0, 0], sizes = [16, 1], strides = [1, 1]} : vector<16x2xf32> to vector<16x1xf32>
    %3 = vector.extract_strided_slice %1 {offsets = [0, 1], sizes = [16, 1], strides = [1, 1]} : vector<16x2xf32> to vector<16x1xf32>
    %4 = vector.broadcast %2 : vector<16x1xf32> to vector<16x1024xf32>
    %5 = arith.mulf %0, %4 : vector<16x1024xf32>
    %6 = vector.broadcast %3 : vector<16x1xf32> to vector<16x1024xf32>
    %7 = arith.addf %5, %6 : vector<16x1024xf32>
    %c0_3 = arith.constant 0 : index
    %c0_4 = arith.constant 0 : index
    %8 = vector.load %arg4[%c0_3, %c0_4] : memref<16x1024xf32, #tpu.memory_space<vmem>>, vector<16x1024xf32>
    tpu.vector_store %arg4[%c0_3, %c0_4], %7 {strides = array<i32>} : memref<16x1024xf32, #tpu.memory_space<vmem>>, vector<16x1024xf32>,
    return
  }
  func.func @transform_0(%arg0: i32, %arg1: i32) -> (i32, i32) {
    %c0_i32 = arith.constant 0 : i32
    return %arg0, %arg1 : i32, i32
  }
  func.func @transform_1(%arg0: i32, %arg1: i32) -> (i32, i32) {
    %c0_i32 = arith.constant 0 : i32
    %c0_i32_0 = arith.constant 0 : i32
    return %arg0, %c0_i32 : i32, i32
  }
  func.func @transform_2(%arg0: i32, %arg1: i32) -> (i32, i32) {
    %c0_i32 = arith.constant 0 : i32
    return %arg0, %arg1 : i32, i32
  }
}

</mosaic_0001>

<llo_original>
// kernel: tpu_custom_call.1
$region0: #{tpu_custom_call.1}
  #allocation0 [shape = 'u32[]', space=smem, size = 0x4, offset = 0x4, fixed_abs, tag = 'smem constant byte address 0x4 - core index']
  #allocation1 [shape = 'u32[144,128]{1,0:T(1,128)}', space=vmem, size = 0x12000, scoped, tag = 'internal scratch']
  %s0 = inlined_call_operand.hbm [shape: f32[24,1024], index: 0, kind: input, shape index: {}]
  %s1 = inlined_call_operand.vmem [shape: f32[24,2], index: 1, kind: input, shape index: {}]
  %s2 = inlined_call_operand.hbm [shape: f32[24,1024], index: 2, kind: output, shape index: {}]
  %s3 = sld [smem:[#allocation0]]
  $region45: #{tpu_custom_call.1} parent=0
    _
  %s5 = ssub.s32 1, %s3
  %s6 = scalar_select 0, %s5, %s3
  $region1: #{tpu_custom_call.1} parent=0
    #allocation2 [shape = 'u8[131072]{0}', space=vmem, size = 0x20000, scoped, tag = 'input window, operand 0']
    #allocation3 [shape = 's32[2]{0}', space=sflag, size = 0x8, scoped, tag = 'scoped memory for tpu_custom_call.1']
    #allocation4 [shape = 's32[2]{0}', space=sflag, size = 0x8, scoped, tag = 'scoped memory for tpu_custom_call.1']
    #allocation5 [shape = 'u8[131072]{0}', space=vmem, size = 0x20000, scoped, tag = 'output window, operand 0']
    %7 = vsyncpa [#allocation3], 0
    %s8 = scalar_lea.sflag [#allocation3], 1
    %9 = vsyncpa %s8, 0
    %10 = vsyncpa [#allocation4], 0
    %s11 = scalar_lea.sflag [#allocation4], 1
    %12 = vsyncpa %s11, 0
    loop: start=0, step=1, limit=4
    $region2: #{tpu_custom_call.1} parent=1 // loop_pre_header
      _
    $region3: #{tpu_custom_call.1} parent=1 // loop_header
      %s14 = sphi 0, %s18
      %p15 = scmp.ge.s32.totalorder %s14, 4
      %s21 = sphi 0, %s33
      %s22 = sphi 0, %s29
      %s23 = sphi 0, %s21
      %s24 = sphi 0, %s22
      %s25 = sphi 0, %s23
      %s26 = sphi 0, %s24
      %s38 = sphi 0, %s40
      %s41 = sphi 0, %s38
      %s42 = sphi 0, %s41
      %s58 = sphi 0, %s42
      %s64 = sphi 0, %s66
      %s67 = sphi 0, %s64
      %s68 = sphi 0, %s67
      %s84 = sphi 0, %s68
      %s92 = sphi 0, %s94
      %s95 = sphi 0, %s92
      %s96 = sphi 0, %s95
      %s112 = sphi 0, %s96
    $region4: #{tpu_custom_call.1} parent=1 // loop_header_branch
      %17 = sbr.rel (%p15) target = $region8
    $region5: #{tpu_custom_call.1} parent=1 // loop_body
      %s19 = ssub.s32 %s14, 1
      %s20 = ssub.s32 %s14, 2
      %s27 = sadd.s32 1, %s22
      %p28 = scmp.ge.s32.totalorder %s27, 1
      %s29 = scalar_select %p28, 0, %s27
      %s30 = sadd.s32 1, %s21
      %s31 = scalar_select %p28, %s30, %s21
      %p32 = scmp.ge.s32.totalorder %s31, 2
      %s33 = scalar_select %p32, 0, %s31
      %s34 = ssub.s32 %s21, %s33
      %s35 = ssub.s32 %s22, %s29
      %s36 = sor.u32 %s34, %s35
      %p37 = scmp.eq.s32.totalorder %s36, 0
      %s39 = sadd.s32 %s38, 1
      %s40 = scalar_select %p37, %s38, %s39
      %p43 = pneg %p37
      %p44 = scmp.eq.s32.totalorder %s14, 1
      %p45 = por %p43, %p44
      %p46 = scmp.ne.s32.totalorder %s38, %s41
      %p47 = scmp.eq.s32.totalorder %s14, 0
      %p48 = por %p46, %p47
      %p49 = scmp.ne.s32.totalorder %s38, %s41
      %p50 = scmp.eq.s32.totalorder %s19, 1
      %p51 = por %p49, %p50
      %p52 = scmp.ne.s32.totalorder %s41, %s42
      %p53 = scmp.eq.s32.totalorder %s19, 0
      %p54 = por %p52, %p53
      %p55 = scmp.ne.s32.totalorder %s41, %s42
      %p56 = scmp.eq.s32.totalorder %s20, 1
      %p57 = por %p55, %p56
      %p59 = scmp.ne.s32.totalorder %s42, %s58
      %p60 = scmp.eq.s32.totalorder %s20, 0
      %p61 = por %p59, %p60
      %s62 = ssub.s32 %s21, %s33
      %p63 = scmp.eq.s32.totalorder %s62, 0
      %s65 = sadd.s32 %s64, 1
      %s66 = scalar_select %p63, %s64, %s65
      %p69 = pneg %p63
      %p70 = scmp.eq.s32.totalorder %s14, 1
      %p71 = por %p69, %p70
      %p72 = scmp.ne.s32.totalorder %s64, %s67
      %p73 = scmp.eq.s32.totalorder %s14, 0
      %p74 = por %p72, %p73
      %p75 = scmp.ne.s32.totalorder %s64, %s67
      %p76 = scmp.eq.s32.totalorder %s19, 1
      %p77 = por %p75, %p76
      %p78 = scmp.ne.s32.totalorder %s67, %s68
      %p79 = scmp.eq.s32.totalorder %s19, 0
      %p80 = por %p78, %p79
      %p81 = scmp.ne.s32.totalorder %s67, %s68
      %p82 = scmp.eq.s32.totalorder %s20, 1
      %p83 = por %p81, %p82
      %p85 = scmp.ne.s32.totalorder %s68, %s84
      %p86 = scmp.eq.s32.totalorder %s20, 0
      %p87 = por %p85, %p86
      %s88 = ssub.s32 %s21, %s33
      %s89 = ssub.s32 %s22, %s29
      %s90 = sor.u32 %s88, %s89
      %p91 = scmp.eq.s32.totalorder %s90, 0
      %s93 = sadd.s32 %s92, 1
      %s94 = scalar_select %p91, %s92, %s93
      %p97 = pneg %p91
      %p98 = scmp.eq.s32.totalorder %s14, 1
      %p99 = por %p97, %p98
      %p100 = scmp.ne.s32.totalorder %s92, %s95
      %p101 = scmp.eq.s32.totalorder %s14, 0
      %p102 = por %p100, %p101
      %p103 = scmp.ne.s32.totalorder %s92, %s95
      %p104 = scmp.eq.s32.totalorder %s19, 1
      %p105 = por %p103, %p104
      %p106 = scmp.ne.s32.totalorder %s95, %s96
      %p107 = scmp.eq.s32.totalorder %s19, 0
      %p108 = por %p106, %p107
      %p109 = scmp.ne.s32.totalorder %s95, %s96
      %p110 = scmp.eq.s32.totalorder %s20, 1
      %p111 = por %p109, %p110
      %p113 = scmp.ne.s32.totalorder %s96, %s112
      %p114 = scmp.eq.s32.totalorder %s20, 0
      %p115 = por %p113, %p114
      %p116 = scmp.le.s32.totalorder 1, %s14
      %p117 = scmp.lt.s32.totalorder %s14, 3
      %p118 = pnand %p116, %p117
      %p119 = pneg %p118
      // Predicated region
      $region9: #{tpu_custom_call.1} parent=5 // pred_check
        _
      $region10: #{tpu_custom_call.1} parent=5 // pred_check_branch
        %121 = sbr.rel (%p118) target = $region12
      $region11: #{tpu_custom_call.1} parent=5 // pred_region
        %s122 = ssub.s32 %s14, 1
      $region12: #{tpu_custom_call.1} parent=5 // pred_fallthru
        _
      %p123 = scmp.lt.s32.totalorder %s14, 2
      // Predicated region
      $region13: #{tpu_custom_call.1} parent=5 // pred_check
        %p124 = pneg %p123
      $region14: #{tpu_custom_call.1} parent=5 // pred_check_branch
        %126 = sbr.rel (%p124) target = $region16
      $region15: #{tpu_custom_call.1} parent=5 // pred_region
        // Predicated region
        $region17: #{tpu_custom_call.1} parent=15 // pred_check
          %p127 = pneg %p48
        $region18: #{tpu_custom_call.1} parent=15 // pred_check_branch
          %129 = sbr.rel (%p127) target = $region20
        $region19: #{tpu_custom_call.1} parent=15 // pred_region
          %s130 = sand.u32 %s38, 1
          %s131 = scalar_lea.sflag [#allocation3], %s130
          %s132 = sand.u32 %s38, 1
          %s133 = smul.addr %s132, 128
          %s134 = scalar_lea.vmem [#allocation2], %s133
          %s135 = smul.u32 2, %s21
          %s136 = smul.u32 8, %s22
          %s137 = ssub.s32 3, %s135
          %p138 = scmp.lt.s32.totalorder %s137, 2
          %s139 = scalar_select %p138, %s137, 2
          %s140 = smul.u32 128, %s139
          %s141 = smul.u32 %s140, 8
          %s143 = ssub.s32 2048, %s141
          %144 = vsyncadd %s131, %s143
          %p145 = scmp.ne.s32.totalorder 0, %s141
          %s146 = smul.addr %s135, 8
          %s147 = sadd.s32 %s136, %s146
          %s148 = smul.addr %s147, 128
          %s149 = scalar_lea.hbm %s0, %s148
          %s150 = smul.u32 64, %s139
          %s151 = sshll.u32 %s134, 4
          %s152 = int_to_ptr.vmem [resolvable:$true] %s151
          %s153 = sshll.u32 %s150, 4
          %157 = dma.hbm_to_vmem [thread:$0]  (%p145), %s149, %s153, %s152, %s131, 1024, 1024, 64
        $region20: #{tpu_custom_call.1} parent=15 // pred_fallthru
          _
        // Predicated region
        $region21: #{tpu_custom_call.1} parent=15 // pred_check
          %p158 = pneg %p74
        $region22: #{tpu_custom_call.1} parent=15 // pred_check_branch
          %160 = sbr.rel (%p158) target = $region24
        $region23: #{tpu_custom_call.1} parent=15 // pred_region
          %s161 = smul.u32 2, %s21
          %s162 = ssub.s32 3, %s161
          %p163 = scmp.lt.s32.totalorder %s162, 2
          %s164 = scalar_select %p163, %s162, 2
          %s165 = smul.u32 128, %s164
          %p166 = scmp.lt.s32.totalorder %s161, 2
          %s167 = scalar_select %p166, %s161, 2
          %s168 = smul.addr %s167, 8
          %s169 = scalar_lea.vmem %s1, %s168
          %s170 = smul.u32 2, %s21
          %s171 = ssub.s32 3, %s170
          %p172 = scmp.lt.s32.totalorder %s171, 2
          %s173 = scalar_select %p172, %s171, 2
          %s174 = smul.u32 128, %s173
        $region24: #{tpu_custom_call.1} parent=15 // pred_fallthru
          _
      $region16: #{tpu_custom_call.1} parent=5 // pred_fallthru
        _
      %p175 = scmp.le.s32.totalorder 1, %s14
      %p176 = scmp.lt.s32.totalorder %s14, 3
      %p177 = pnand %p175, %p176
      %p178 = pneg %p177
      // Predicated region
      $region25: #{tpu_custom_call.1} parent=5 // pred_check
        _
      $region26: #{tpu_custom_call.1} parent=5 // pred_check_branch
        %180 = sbr.rel (%p177) target = $region28
      $region27: #{tpu_custom_call.1} parent=5 // pred_region
        %s181 = ssub.s32 %s14, 1
        %s182 = sand.u32 %s41, 1
        %s183 = scalar_lea.sflag [#allocation3], %s182
        %s184 = sand.u32 %s41, 1
        %s185 = smul.addr %s184, 128
        %s186 = scalar_lea.vmem [#allocation2], %s185
        // Predicated region
        $region29: #{tpu_custom_call.1} parent=27 // pred_check
          %p187 = pneg %p54
        $region30: #{tpu_custom_call.1} parent=27 // pred_check_branch
          %189 = sbr.rel (%p187) target = $region32
        $region31: #{tpu_custom_call.1} parent=27 // pred_region
          %190 = dma.done %s183, 2048
        $region32: #{tpu_custom_call.1} parent=27 // pred_fallthru
          _
        %s191 = sand.u32 %s41, 1
        %s192 = scalar_lea.sflag [#allocation3], %s191
        %s193 = sand.u32 %s41, 1
        %s194 = smul.addr %s193, 128
        %s195 = scalar_lea.vmem [#allocation2], %s194
        %p196 = pneg %p54
        %p197 = pneg %p51
        %s198 = smul.u32 2, %s23
        %s199 = ssub.s32 3, %s198
        %p200 = scmp.lt.s32.totalorder %s199, 2
        %s201 = scalar_select %p200, %s199, 2
        %s202 = smul.u32 128, %s201
        %p203 = scmp.lt.s32.totalorder %s198, 2
        %s204 = scalar_select %p203, %s198, 2
        %s205 = smul.addr %s204, 8
        %s206 = scalar_lea.vmem %s1, %s205
        %p207 = pneg %p80
        %p208 = pneg %p77
        %p209 = pneg %p108
        %p210 = pneg %p105
        %s211 = sand.u32 %s95, 1
        %s212 = scalar_lea.sflag [#allocation4], %s211
        %s213 = sand.u32 %s95, 1
        %s214 = smul.addr %s213, 128
        %s215 = scalar_lea.vmem [#allocation5], %s214
        %s216 = smul.u32 2, %s23
        %s217 = smul.u32 8, %s24
        %s218 = ssub.s32 3, %s216
        %p219 = scmp.lt.s32.totalorder %s218, 2
        %s220 = scalar_select %p219, %s218, 2
        %s221 = smul.u32 128, %s220
        %s222 = smul.u32 %s221, 8
        %s223 = smul.u32 2, %s23
        %s224 = ssub.s32 3, %s223
        %p225 = scmp.lt.s32.totalorder %s224, 2
        %s226 = scalar_select %p225, %s224, 2
        %s227 = smul.u32 128, %s226
        %p228 = scmp.lt.s32.totalorder %s223, 2
        %s229 = scalar_select %p228, %s223, 2
        %s230 = smul.addr %s229, 8
        %s231 = scalar_lea.vmem %s1, %s230
        %s232 = smul.u32 2, %s23
        %s233 = ssub.s32 3, %s232
        %p234 = scmp.lt.s32.totalorder %s233, 2
        %s235 = scalar_select %p234, %s233, 2
        %s236 = smul.u32 128, %s235
        %s237 = smul.u32 2, %s23
        %s238 = smul.u32 8, %s24
        %s239 = ssub.s32 3, %s237
        %p240 = scmp.lt.s32.totalorder %s239, 2
        %s241 = scalar_select %p240, %s239, 2
        %s242 = smul.u32 128, %s241
        %s243 = smul.u32 %s242, 8
        %v244 = vld [vmem:[%s186] sm:$0xff]
        %v245 = vld [vmem:[%s186 + $0x8] sm:$0xff]
        %v246 = vld [vmem:[%s186 + $0x10] sm:$0xff]
        %v247 = vld [vmem:[%s186 + $0x18] sm:$0xff]
        %v248 = vld [vmem:[%s186 + $0x20] sm:$0xff]
        %v249 = vld [vmem:[%s186 + $0x28] sm:$0xff]
        %v250 = vld [vmem:[%s186 + $0x30] sm:$0xff]
        %v251 = vld [vmem:[%s186 + $0x38] sm:$0xff]
        %v252 = vld [vmem:[%s186 + $0x40] sm:$0xff]
        %v253 = vld [vmem:[%s186 + $0x48] sm:$0xff]
        %v254 = vld [vmem:[%s186 + $0x50] sm:$0xff]
        %v255 = vld [vmem:[%s186 + $0x58] sm:$0xff]
        %v256 = vld [vmem:[%s186 + $0x60] sm:$0xff]
        %v257 = vld [vmem:[%s186 + $0x68] sm:$0xff]
        %v258 = vld [vmem:[%s186 + $0x70] sm:$0xff]
        %v259 = vld [vmem:[%s186 + $0x78] sm:$0xff]
        %v260 = vld [vmem:[%s231] sm:$0xff]
        %v261 = vld [vmem:[%s231 + $0x8] sm:$0xff]
        %263 = vset.pattern.permute.xlu0 0
        %264 = vperm.xlu0 %263, %v260
        %v265 = vpop.permute.xlu0 %264
        %268 = vset.pattern.permute.xlu0 0
        %269 = vperm.xlu0 %268, %v261
        %v270 = vpop.permute.xlu0 %269
        %v272 = vmul.f32 %v244, %v265
        %v273 = vmul.f32 %v245, %v265
        %v274 = vmul.f32 %v246, %v265
        %v275 = vmul.f32 %v247, %v265
        %v276 = vmul.f32 %v248, %v265
        %v277 = vmul.f32 %v249, %v265
        %v278 = vmul.f32 %v250, %v265
        %v279 = vmul.f32 %v251, %v265
        %v280 = vmul.f32 %v252, %v270
        %v281 = vmul.f32 %v253, %v270
        %v282 = vmul.f32 %v254, %v270
        %v283 = vmul.f32 %v255, %v270
        %v284 = vmul.f32 %v256, %v270
        %v285 = vmul.f32 %v257, %v270
        %v286 = vmul.f32 %v258, %v270
        %v287 = vmul.f32 %v259, %v270
        %288 = vset.pattern.permute.xlu0 1
        %289 = vperm.xlu0 %288, %v260
        %v290 = vpop.permute.xlu0 %289
        %292 = vset.pattern.permute.xlu0 1
        %293 = vperm.xlu0 %292, %v261
        %v294 = vpop.permute.xlu0 %293
        %v296 = vadd.f32 %v272, %v290
        %v297 = vadd.f32 %v273, %v290
        %v298 = vadd.f32 %v274, %v290
        %v299 = vadd.f32 %v275, %v290
        %v300 = vadd.f32 %v276, %v290
        %v301 = vadd.f32 %v277, %v290
        %v302 = vadd.f32 %v278, %v290
        %v303 = vadd.f32 %v279, %v290
        %v304 = vadd.f32 %v280, %v294
        %v305 = vadd.f32 %v281, %v294
        %v306 = vadd.f32 %v282, %v294
        %v307 = vadd.f32 %v283, %v294
        %v308 = vadd.f32 %v284, %v294
        %v309 = vadd.f32 %v285, %v294
        %v310 = vadd.f32 %v286, %v294
        %v311 = vadd.f32 %v287, %v294
        %312 = vst [vmem:[%s215] sm:$0xff] %v296
        %313 = vst [vmem:[%s215 + $0x8] sm:$0xff] %v297
        %314 = vst [vmem:[%s215 + $0x10] sm:$0xff] %v298
        %315 = vst [vmem:[%s215 + $0x18] sm:$0xff] %v299
        %316 = vst [vmem:[%s215 + $0x20] sm:$0xff] %v300
        %317 = vst [vmem:[%s215 + $0x28] sm:$0xff] %v301
        %318 = vst [vmem:[%s215 + $0x30] sm:$0xff] %v302
        %319 = vst [vmem:[%s215 + $0x38] sm:$0xff] %v303
        %320 = vst [vmem:[%s215 + $0x40] sm:$0xff] %v304
        %321 = vst [vmem:[%s215 + $0x48] sm:$0xff] %v305
        %322 = vst [vmem:[%s215 + $0x50] sm:$0xff] %v306
        %323 = vst [vmem:[%s215 + $0x58] sm:$0xff] %v307
        %324 = vst [vmem:[%s215 + $0x60] sm:$0xff] %v308
        %325 = vst [vmem:[%s215 + $0x68] sm:$0xff] %v309
        %326 = vst [vmem:[%s215 + $0x70] sm:$0xff] %v310
        %327 = vst [vmem:[%s215 + $0x78] sm:$0xff] %v311
        %s328 = sand.u32 %s95, 1
        %s329 = scalar_lea.sflag [#allocation4], %s328
        %s330 = sand.u32 %s95, 1
        %s331 = smul.addr %s330, 128
        %s332 = scalar_lea.vmem [#allocation5], %s331
        // Predicated region
        $region33: #{tpu_custom_call.1} parent=27 // pred_check
          %p333 = pneg %p105
        $region34: #{tpu_custom_call.1} parent=27 // pred_check_branch
          %335 = sbr.rel (%p333) target = $region36
        $region35: #{tpu_custom_call.1} parent=27 // pred_region
          %s336 = smul.u32 2, %s23
          %s337 = smul.u32 8, %s24
          %s338 = ssub.s32 3, %s336
          %p339 = scmp.lt.s32.totalorder %s338, 2
          %s340 = scalar_select %p339, %s338, 2
          %s341 = smul.u32 128, %s340
          %s342 = smul.u32 %s341, 8
          %s344 = ssub.s32 2048, %s342
          %345 = vsyncadd %s329, %s344
          %p346 = scmp.ne.s32.totalorder 0, %s342
          %s347 = smul.addr %s336, 8
          %s348 = sadd.s32 %s337, %s347
          %s349 = smul.addr %s348, 128
          %s350 = scalar_lea.hbm %s2, %s349
          %s351 = smul.u32 64, %s340
          %s352 = sshll.u32 %s332, 4
          %s353 = int_to_ptr.vmem [resolvable:$true] %s352
          %s354 = sshll.u32 %s351, 4
          %358 = dma.vmem_to_hbm [thread:$0]  (%p346), %s353, %s354, %s350, %s329, 1024, 1024, 64
        $region36: #{tpu_custom_call.1} parent=27 // pred_fallthru
          _
      $region28: #{tpu_custom_call.1} parent=5 // pred_fallthru
        _
      %p359 = scmp.le.s32.totalorder 2, %s14
      // Predicated region
      $region37: #{tpu_custom_call.1} parent=5 // pred_check
        %p360 = pneg %p359
      $region38: #{tpu_custom_call.1} parent=5 // pred_check_branch
        %362 = sbr.rel (%p360) target = $region40
      $region39: #{tpu_custom_call.1} parent=5 // pred_region
        %s363 = ssub.s32 %s14, 2
        // Predicated region
        $region41: #{tpu_custom_call.1} parent=39 // pred_check
          %p364 = pneg %p111
        $region42: #{tpu_custom_call.1} parent=39 // pred_check_branch
          %366 = sbr.rel (%p364) target = $region44
        $region43: #{tpu_custom_call.1} parent=39 // pred_region
          %s367 = sand.u32 %s96, 1
          %s368 = scalar_lea.sflag [#allocation4], %s367
          %s369 = sand.u32 %s96, 1
          %s370 = smul.addr %s369, 128
          %s371 = scalar_lea.vmem [#allocation5], %s370
          %372 = dma.done %s368, 2048
        $region44: #{tpu_custom_call.1} parent=39 // pred_fallthru
          _
      $region40: #{tpu_custom_call.1} parent=5 // pred_fallthru
        _
    $region6: #{tpu_custom_call.1} parent=1 // loop_footer
      %s18 = sadd.s32 1, %s14
    $region7: #{tpu_custom_call.1} parent=1 // loop_footer_branch
      %13 = sbr.rel target = $region3
    $region8: #{tpu_custom_call.1} parent=1 // loop_exit
      _
    %373 = vsyncpa [#allocation3], 1
    %s374 = scalar_lea.sflag [#allocation3], 1
    %375 = vsyncpa %s374, 1
    %376 = vsyncpa [#allocation4], 1
    %s377 = scalar_lea.sflag [#allocation4], 1
    %378 = vsyncpa %s377, 1

</llo_original>
